<compile_context>
chip_gen: v7x
topology: tpu7x:2x2x1
jax: 0.10.0
libtpu: 0.0.40
codegen_flags: <defaults>
</compile_context>

<pallas_src>
import jax
import jax.numpy as jnp
from jax.experimental import pallas as pl
from jax.experimental.pallas import tpu as pltpu


# ------------------------------ hyper-params ------------------------------
SEG_NUM = 64              # hparams.seg_num
D_SEG = 16                # hparams.d_seg
D_S = 2 * D_SEG + 2       # hparams.d_s (use_offset=True)
D_M7 = 32                 # hparams.d_m7
D_M8 = 16                 # hparams.d_m8
MASK_SIZE = 8             # hparams.mask_size
N_TIME = 24               # traffic_popularity time buckets
CAND_EMB = 4              # candidate_layer = nn.Linear(2, 4)
D_SUB = D_M8 - CAND_EMB   # dense = nn.Linear(D_M8 - 4, SEG_NUM)
BN_EPS = 1e-6             # module explicitly sets nn.BatchNorm1d(eps=1e-06)
COS_EPS = 1e-8
# <= ~48 MiB keeps v7x (64 MiB physical) safe; raiseable to 64-96 MiB on v5e/v6e
# if block_b is pushed past 4096.
VMEM_LIMIT = 48 * 1024 * 1024


# --------------------------------- kernel ----------------------------------
def keyseg_kernel(ints_ref, off_ref,
                  gather_ref, w1_off_ref, b1_ref, bn_scale_ref, bn_shift_ref,
                  w2_ref, b2_ref, head_ref, dense_b_ref, traffic_t_ref, seg_ref,
                  out_ref):
    bt = out_ref.shape[0]
    ints = ints_ref[...]                       # (BT, 3) int32: [src, dst, t]
    src = ints[:, 0:1]
    dst = ints[:, 1:2]
    t = ints[:, 2:3]

    # ---- fused gather: [onehot(src) | onehot(dst)] @ [[a_o, 0],[a_d, segs_src]]
    #      K=128 exactly fills one MXU pass; cols 0..31 = hidden partial,
    #      cols 32..33 = segs_src[dest].
    iota2 = jax.lax.broadcasted_iota(jnp.int32, (bt, 2 * SEG_NUM), 1)
    oh = ((iota2 == src) | (iota2 == dst + SEG_NUM)).astype(jnp.float32)
    g = jnp.dot(oh, gather_ref[...], preferred_element_type=jnp.float32)   # (BT, 34)

    # ---- MLP: Linear -> BatchNorm1d(folded full-batch train stats) -> ReLU -> Linear
    h = (g[:, :D_M7]
         + jnp.dot(off_ref[...], w1_off_ref[...], preferred_element_type=jnp.float32)
         + b1_ref[...])
    h = jnp.maximum(h * bn_scale_ref[...] + bn_shift_ref[...], 0.0)
    # TODO(synk): nn.Dropout is stochastic in train mode; deterministic identity here.
    mlp_out = jnp.dot(h, w2_ref[...], preferred_element_type=jnp.float32) + b2_ref[...]

    # ---- merged head: dense-head score for every segment + tail projections
    #      head[:, :64] = mlp_out[:, :12] @ dense_w.T ; head[:, 64:67] = [a0, a1, a2]
    head = jnp.dot(mlp_out, head_ref[...], preferred_element_type=jnp.float32)  # (BT, 67)
    scores_dense = head[:, :SEG_NUM] + dense_b_ref[...]
    a0 = head[:, SEG_NUM:SEG_NUM + 1]          # wc[0] . tail   (cos coefficient)
    a1 = head[:, SEG_NUM + 1:SEG_NUM + 2]      # wc[1] . tail   (traffic coefficient)
    a2 = head[:, SEG_NUM + 2:SEG_NUM + 3]      # bc    . tail   (bias term)

    # ---- traffic_popularity[s, t] for every segment (one-hot time on the MXU)
    iota_t = jax.lax.broadcasted_iota(jnp.int32, (bt, N_TIME), 1)
    oh_t = (t == iota_t).astype(jnp.float32)
    traffic_all = jnp.dot(oh_t, traffic_t_ref[...],
                          preferred_element_type=jnp.float32)               # (BT, 64)

    # ---- cosine similarity for every segment on lane-dense (BT, 64) planes
    dsx = g[:, D_M7:D_M7 + 1]                  # segs_src[dest].x
    dsy = g[:, D_M7 + 1:D_M7 + 2]              # segs_src[dest].y
    sx = seg_ref[0:1, :]
    sy = seg_ref[1:2, :]
    v2x = seg_ref[2:3, :]
    v2y = seg_ref[3:4, :]
    sq2 = seg_ref[4:5, :]
    v1x = dsx - sx
    v1y = dsy - sy
    dotp = v1x * v2x + v1y * v2y
    sq1 = v1x * v1x + v1y * v1y
    # cos = dot / max(||v1||*||v2||, eps) == dot * rsqrt(max(sq1*sq2, eps^2))
    cos_all = dotp * jax.lax.rsqrt(jnp.maximum(sq1 * sq2, COS_EPS * COS_EPS))

    # ---- lane-dense full per-segment score (candidate gather happens in the wrapper)
    out_ref[...] = scores_dense + a1 * traffic_all + a0 * cos_all + a2      # (BT, 64)


# ------------------------------ wrapper ------------------------------------
def keyseg_forward(params, src, dest, offset, t, candidates, *, block_b=2048):
    """Forward pass of KeySegPred (train_phase=True, use_traffic4key=True)."""
    B = src.shape[0]
    hp = jax.lax.Precision.HIGHEST

    # ---- fold parameters into small lane-friendly VMEM tables
    w1 = params["w1"]
    b1 = params["b1"]
    emb_src = params["emb_src"]
    emb_dst = params["emb_dst"]
    a_o = jnp.dot(emb_src, w1[:D_SEG], precision=hp)               # (64, 32)
    a_d = jnp.dot(emb_dst, w1[D_SEG:2 * D_SEG], precision=hp)      # (64, 32)
    w1_off = w1[2 * D_SEG:]                                        # (2, 32)
    segs_src = params["segs_src"].astype(jnp.float32)              # (64, 2)
    gather_tab = jnp.concatenate(
        [jnp.concatenate([a_o, jnp.zeros((SEG_NUM, 2), jnp.float32)], axis=1),
         jnp.concatenate([a_d, segs_src], axis=1)], axis=0)        # (128, 34)

    # ---- BatchNorm1d train-mode statistics over the FULL batch, in plain XLA
    #      (tiny (B,34)@(34,32) matmul + reduce; removes the serial stats pass)
    off2 = offset[:, 1:3].astype(jnp.float32)
    vec_od = jnp.concatenate([emb_src[src], emb_dst[dest], off2], axis=1)
    h_pre = jnp.dot(vec_od, w1, precision=hp) + b1
    mean = jnp.mean(h_pre, axis=0, keepdims=True)
    var = jnp.mean(jnp.square(h_pre - mean), axis=0, keepdims=True)   # biased (BN train)
    inv_std = jax.lax.rsqrt(var + BN_EPS)
    bn_scale = params["gamma"] * inv_std
    bn_shift = params["beta"] - mean * bn_scale

    w2, b2 = params["w2"], params["b2"]
    # merged (16, 67) head table: [dense_w.T (zero-extended) | tail projections]
    wd_ext = jnp.concatenate(
        [params["dense_w"].T, jnp.zeros((CAND_EMB, SEG_NUM), jnp.float32)], axis=0)
    p_tail = jnp.concatenate(
        [jnp.zeros((D_SUB, 3), jnp.float32),
         jnp.stack([params["wc"][0], params["wc"][1], params["bc"][0]], axis=1)],
        axis=0)
    head_tab = jnp.concatenate([wd_ext, p_tail], axis=1)           # (16, 67)
    dense_b = params["dense_b"][None, :]                           # (1, 64)
    traffic_t = params["traffic_popularity"].T                     # (24, 64)
    sx, sy = segs_src[:, 0], segs_src[:, 1]
    tx = params["segs_trg"][:, 0].astype(jnp.float32)
    ty = params["segs_trg"][:, 1].astype(jnp.float32)
    v2x, v2y = tx - sx, ty - sy
    seg_tab = jnp.stack([sx, sy, v2x, v2y, v2x * v2x + v2y * v2y], axis=0)  # (5, 64)

    # ---- pack per-row inputs and pad the batch to a tile multiple
    bt = block_b if B >= block_b else max(8, ((B + 7) // 8) * 8)
    b_pad = ((B + bt - 1) // bt) * bt
    nb = b_pad // bt
    pad = b_pad - B

    ints = jnp.stack([src.astype(jnp.int32), dest.astype(jnp.int32),
                      t.astype(jnp.int32)], axis=1)                # (B, 3)
    ints_c = jnp.pad(ints, ((0, pad), (0, 0)))
    off_c = jnp.pad(off2, ((0, pad), (0, 0)))

    def row_spec(k):
        return pl.BlockSpec((bt, k), lambda i: (i, 0))

    def tab_spec(a):
        return pl.BlockSpec(a.shape, lambda i: (0, 0))

    tables = (gather_tab, w1_off, b1, bn_scale, bn_shift, w2, b2,
              head_tab, dense_b, traffic_t, seg_tab)

    cost = pl.CostEstimate(
        flops=int(b_pad) * 2 * (128 * 34 + 2 * 32 + 32 * 16 + 16 * 67 + 24 * 64
                                + 6 * 64),
        transcendentals=int(b_pad) * 64,
        bytes_accessed=int(b_pad) * (3 * 4 + 2 * 4 + 64 * 4))

    full = pl.pallas_call(
        keyseg_kernel,
        grid=(nb,),
        in_specs=[row_spec(3), row_spec(2)] + [tab_spec(a) for a in tables],
        out_specs=pl.BlockSpec((bt, SEG_NUM), lambda i: (i, 0)),
        out_shape=jax.ShapeDtypeStruct((b_pad, SEG_NUM), jnp.float32),
        compiler_params=pltpu.CompilerParams(
            dimension_semantics=("parallel",),
            vmem_limit_bytes=VMEM_LIMIT),
        cost_estimate=cost,
    )(ints_c, off_c, *tables)

    # candidate-column gather on the lane-dense score plane (free in XLA)
    return jnp.take_along_axis(full[:B], candidates.astype(jnp.int32), axis=1)


# ------------------------------ param init ---------------------------------
def init_params(key):
    ks = jax.random.split(key, 12)
    p = {
        "emb_src": jax.random.normal(ks[0], (SEG_NUM, D_SEG), jnp.float32) * 0.1,
        "emb_dst": jax.random.normal(ks[1], (SEG_NUM, D_SEG), jnp.float32) * 0.1,
        # MLP: Linear(D_S, D_M7) -> BN(D_M7, eps=1e-6) -> ReLU -> Dropout -> Linear(D_M7, D_M8)
        "w1": jax.random.normal(ks[2], (D_S, D_M7), jnp.float32) * 0.1,
        "b1": jax.random.normal(ks[3], (1, D_M7), jnp.float32) * 0.01,
        "gamma": jnp.ones((1, D_M7), jnp.float32),
        "beta": jnp.zeros((1, D_M7), jnp.float32),
        "w2": jax.random.normal(ks[4], (D_M7, D_M8), jnp.float32) * 0.1,
        "b2": jax.random.normal(ks[5], (1, D_M8), jnp.float32) * 0.01,
        # dense = Linear(D_M8 - 4, SEG_NUM): weight (SEG_NUM, D_SUB), bias (SEG_NUM,)
        "dense_w": jax.random.normal(ks[6], (SEG_NUM, D_SUB), jnp.float32) * 0.1,
        "dense_b": jax.random.normal(ks[7], (SEG_NUM,), jnp.float32) * 0.01,
        # candidate_layer = Linear(2, 4): stored transposed (2, 4)
        "wc": jax.random.normal(ks[8], (2, CAND_EMB), jnp.float32) * 0.1,
        "bc": jax.random.normal(ks[9], (1, CAND_EMB), jnp.float32) * 0.01,
        "traffic_popularity": jax.random.uniform(ks[10], (SEG_NUM, N_TIME), jnp.float32),
    }
    segs_geo = jax.random.normal(ks[11], (SEG_NUM, 4), jnp.float32)
    p["segs_src"] = segs_geo[:, :2]
    p["segs_trg"] = segs_geo[:, 2:]
    return p


# --------------------------- pure-JAX reference -----------------------------
def keyseg_reference(params, src, dest, offset, t, candidates):
    hp = jax.lax.Precision.HIGHEST
    emb_o = params["emb_src"][src]
    emb_d = params["emb_dst"][dest]
    vec_od = jnp.concatenate([emb_o, emb_d, offset[:, 1:3]], axis=1)
    h = jnp.dot(vec_od, params["w1"], precision=hp) + params["b1"]
    mean = jnp.mean(h, axis=0, keepdims=True)
    var = jnp.mean((h - mean) ** 2, axis=0, keepdims=True)
    h = (h - mean) / jnp.sqrt(var + BN_EPS) * params["gamma"] + params["beta"]
    h = jnp.maximum(h, 0.0)
    mlp_out = jnp.dot(h, params["w2"], precision=hp) + params["b2"]

    sub_w = params["dense_w"][candidates]
    sub_b = params["dense_b"][candidates]
    traffic = params["traffic_popularity"][candidates, t[:, None]]
    vec1 = params["segs_src"][dest][:, None, :] - params["segs_src"][candidates]
    vec2 = params["segs_trg"][candidates] - params["segs_src"][candidates]
    dotp = jnp.sum(vec1 * vec2, axis=-1)
    n1 = jnp.sqrt(jnp.sum(vec1 * vec1, axis=-1))
    n2 = jnp.sqrt(jnp.sum(vec2 * vec2, axis=-1))
    cos = dotp / jnp.maximum(n1 * n2, COS_EPS)
    feat = jnp.stack([cos, traffic], axis=-1)
    emb_c = jnp.einsum("bmf,fe->bme", feat, params["wc"], precision=hp) + params["bc"]
    w_full = jnp.concatenate([sub_w, emb_c], axis=-1)
    return jnp.einsum("bmd,bd->bm", w_full, mlp_out, precision=hp) + sub_b


# ------------------------------ main ----------------------------------------
if __name__ == "__main__":
    key = jax.random.PRNGKey(0)
    kp, k1, k2, k3, k4, k5 = jax.random.split(key, 6)

    params = init_params(kp)

    B = 8
    src = jax.random.randint(k1, (B,), 0, SEG_NUM, dtype=jnp.int32)
    dest = jax.random.randint(k2, (B,), 0, SEG_NUM, dtype=jnp.int32)
    offset = jax.random.normal(k3, (B, 4), jnp.float32)
    t = jax.random.randint(k4, (B,), 0, N_TIME, dtype=jnp.int32)
    candidates = jax.random.randint(k5, (B, MASK_SIZE), 0, SEG_NUM, dtype=jnp.int32)

    out = keyseg_forward(params, src, dest, offset, t, candidates)
    out = jax.block_until_ready(out)
    assert out.shape == (B, MASK_SIZE) and out.dtype == jnp.float32

    ref = jax.block_until_ready(keyseg_reference(params, src, dest, offset, t, candidates))
    assert bool(jnp.allclose(out, ref, rtol=2e-2, atol=5e-3)), "mismatch vs JAX reference"

    print("KERNEL_OK")
</pallas_src>

<mosaic_0001>
module attributes {stable_mosaic.version = 11 : i64} {
  func.func @keyseg_kernel(%arg0: i32, %arg1: memref<8x3xi32, #tpu.memory_space<vmem>>, %arg2: memref<8x2xf32, #tpu.memory_space<vmem>>, %arg3: memref<128x34xf32, #tpu.memory_space<vmem>>, %arg4: memref<2x32xf32, #tpu.memory_space<vmem>>, %arg5: memref<1x32xf32, #tpu.memory_space<vmem>>, %arg6: memref<1x32xf32, #tpu.memory_space<vmem>>, %arg7: memref<1x32xf32, #tpu.memory_space<vmem>>, %arg8: memref<32x16xf32, #tpu.memory_space<vmem>>, %arg9: memref<1x16xf32, #tpu.memory_space<vmem>>, %arg10: memref<16x67xf32, #tpu.memory_space<vmem>>, %arg11: memref<1x64xf32, #tpu.memory_space<vmem>>, %arg12: memref<24x64xf32, #tpu.memory_space<vmem>>, %arg13: memref<5x64xf32, #tpu.memory_space<vmem>>, %arg14: memref<8x64xf32, #tpu.memory_space<vmem>>) attributes {dimension_semantics = [#tpu.dimension_semantics<parallel>], iteration_bounds = array<i64: 1>, scalar_prefetch = 0 : i64, scratch_operands = 0 : i64, tpu.core_type = #tpu.core_type<tc>, window_params = [{transform_indices = @transform_0, window_bounds = array<i64: 8, 3>}, {transform_indices = @transform_1, window_bounds = array<i64: 8, 2>}, {pipeline_mode = #tpu.pipeline_mode<synchronous>, transform_indices = @transform_2, window_bounds = array<i64: 128, 34>}, {pipeline_mode = #tpu.pipeline_mode<synchronous>, transform_indices = @transform_3, window_bounds = array<i64: 2, 32>}, {pipeline_mode = #tpu.pipeline_mode<synchronous>, transform_indices = @transform_4, window_bounds = array<i64: 1, 32>}, {pipeline_mode = #tpu.pipeline_mode<synchronous>, transform_indices = @transform_5, window_bounds = array<i64: 1, 32>}, {pipeline_mode = #tpu.pipeline_mode<synchronous>, transform_indices = @transform_6, window_bounds = array<i64: 1, 32>}, {pipeline_mode = #tpu.pipeline_mode<synchronous>, transform_indices = @transform_7, window_bounds = array<i64: 32, 16>}, {pipeline_mode = #tpu.pipeline_mode<synchronous>, transform_indices = @transform_8, window_bounds = array<i64: 1, 16>}, {pipeline_mode = #tpu.pipeline_mode<synchronous>, transform_indices = @transform_9, window_bounds = array<i64: 16, 67>}, {pipeline_mode = #tpu.pipeline_mode<synchronous>, transform_indices = @transform_10, window_bounds = array<i64: 1, 64>}, {pipeline_mode = #tpu.pipeline_mode<synchronous>, transform_indices = @transform_11, window_bounds = array<i64: 24, 64>}, {pipeline_mode = #tpu.pipeline_mode<synchronous>, transform_indices = @transform_12, window_bounds = array<i64: 5, 64>}, {transform_indices = @transform_13, window_bounds = array<i64: 8, 64>}]} {
    %c0 = arith.constant 0 : index
    %c0_0 = arith.constant 0 : index
    %0 = vector.load %arg1[%c0, %c0_0] : memref<8x3xi32, #tpu.memory_space<vmem>>, vector<8x3xi32>
    %1 = vector.extract_strided_slice %0 {offsets = [0, 0], sizes = [8, 1], strides = [1, 1]} : vector<8x3xi32> to vector<8x1xi32>
    %2 = vector.extract_strided_slice %0 {offsets = [0, 1], sizes = [8, 1], strides = [1, 1]} : vector<8x3xi32> to vector<8x1xi32>
    %3 = vector.extract_strided_slice %0 {offsets = [0, 2], sizes = [8, 1], strides = [1, 1]} : vector<8x3xi32> to vector<8x1xi32>
    %4 = tpu.iota {dimensions = array<i32: 1>} : vector<8x128xi32>
    %5 = vector.broadcast %1 : vector<8x1xi32> to vector<8x128xi32>
    %6 = arith.cmpi eq, %4, %5 : vector<8x128xi32>
    %c64_i32 = arith.constant 64 : i32
    %7 = vector.broadcast %c64_i32 : i32 to vector<8x1xi32>
    %8 = arith.addi %2, %7 : vector<8x1xi32>
    %9 = vector.broadcast %8 : vector<8x1xi32> to vector<8x128xi32>
    %10 = arith.cmpi eq, %4, %9 : vector<8x128xi32>
    %11 = arith.ori %6, %10 : vector<8x128xi1>
    %12 = arith.extui %11 : vector<8x128xi1> to vector<8x128xi32>
    %13 = arith.sitofp %12 : vector<8x128xi32> to vector<8x128xf32>
    %c0_1 = arith.constant 0 : index
    %c0_2 = arith.constant 0 : index
    %14 = vector.load %arg3[%c0_1, %c0_2] : memref<128x34xf32, #tpu.memory_space<vmem>>, vector<128x34xf32>
    %cst = arith.constant dense<0.000000e+00> : vector<8x34xf32>
    %15 = tpu.matmul %13, %14, %cst {dimension_numbers = #tpu.dot_dimension_numbers<[1], [0], [0], [1], [0, 0, 1, 1], [], []>} : vector<8x128xf32>, vector<128x34xf32>, vector<8x34xf32> -> vector<8x34xf32>
    %16 = vector.extract_strided_slice %15 {offsets = [0, 0], sizes = [8, 32], strides = [1, 1]} : vector<8x34xf32> to vector<8x32xf32>
    %c0_3 = arith.constant 0 : index
    %c0_4 = arith.constant 0 : index
    %17 = vector.load %arg2[%c0_3, %c0_4] : memref<8x2xf32, #tpu.memory_space<vmem>>, vector<8x2xf32>
    %c0_5 = arith.constant 0 : index
    %c0_6 = arith.constant 0 : index
    %18 = vector.load %arg4[%c0_5, %c0_6] : memref<2x32xf32, #tpu.memory_space<vmem>>, vector<2x32xf32>
    %cst_7 = arith.constant dense<0.000000e+00> : vector<8x32xf32>
    %19 = tpu.matmul %17, %18, %cst_7 {dimension_numbers = #tpu.dot_dimension_numbers<[1], [0], [0], [1], [0, 0, 1, 1], [], []>} : vector<8x2xf32>, vector<2x32xf32>, vector<8x32xf32> -> vector<8x32xf32>
    %20 = arith.addf %16, %19 : vector<8x32xf32>
    %c0_8 = arith.constant 0 : index
    %c0_9 = arith.constant 0 : index
    %21 = vector.load %arg5[%c0_8, %c0_9] : memref<1x32xf32, #tpu.memory_space<vmem>>, vector<1x32xf32>
    %22 = vector.broadcast %21 : vector<1x32xf32> to vector<8x32xf32>
    %23 = arith.addf %20, %22 : vector<8x32xf32>
    %c0_10 = arith.constant 0 : index
    %c0_11 = arith.constant 0 : index
    %24 = vector.load %arg6[%c0_10, %c0_11] : memref<1x32xf32, #tpu.memory_space<vmem>>, vector<1x32xf32>
    %25 = vector.broadcast %24 : vector<1x32xf32> to vector<8x32xf32>
    %26 = arith.mulf %23, %25 : vector<8x32xf32>
    %c0_12 = arith.constant 0 : index
    %c0_13 = arith.constant 0 : index
    %27 = vector.load %arg7[%c0_12, %c0_13] : memref<1x32xf32, #tpu.memory_space<vmem>>, vector<1x32xf32>
    %28 = vector.broadcast %27 : vector<1x32xf32> to vector<8x32xf32>
    %29 = arith.addf %26, %28 : vector<8x32xf32>
    %cst_14 = arith.constant 0.000000e+00 : f32
    %30 = vector.broadcast %cst_14 : f32 to vector<8x32xf32>
    %31 = arith.maximumf %29, %30 : vector<8x32xf32>
    %c0_15 = arith.constant 0 : index
    %c0_16 = arith.constant 0 : index
    %32 = vector.load %arg8[%c0_15, %c0_16] : memref<32x16xf32, #tpu.memory_space<vmem>>, vector<32x16xf32>
    %cst_17 = arith.constant dense<0.000000e+00> : vector<8x16xf32>
    %33 = tpu.matmul %31, %32, %cst_17 {dimension_numbers = #tpu.dot_dimension_numbers<[1], [0], [0], [1], [0, 0, 1, 1], [], []>} : vector<8x32xf32>, vector<32x16xf32>, vector<8x16xf32> -> vector<8x16xf32>
    %c0_18 = arith.constant 0 : index
    %c0_19 = arith.constant 0 : index
    %34 = vector.load %arg9[%c0_18, %c0_19] : memref<1x16xf32, #tpu.memory_space<vmem>>, vector<1x16xf32>
    %35 = vector.broadcast %34 : vector<1x16xf32> to vector<8x16xf32>
    %36 = arith.addf %33, %35 : vector<8x16xf32>
    %c0_20 = arith.constant 0 : index
    %c0_21 = arith.constant 0 : index
    %37 = vector.load %arg10[%c0_20, %c0_21] : memref<16x67xf32, #tpu.memory_space<vmem>>, vector<16x67xf32>
    %cst_22 = arith.constant dense<0.000000e+00> : vector<8x67xf32>
    %38 = tpu.matmul %36, %37, %cst_22 {dimension_numbers = #tpu.dot_dimension_numbers<[1], [0], [0], [1], [0, 0, 1, 1], [], []>} : vector<8x16xf32>, vector<16x67xf32>, vector<8x67xf32> -> vector<8x67xf32>
    %39 = vector.extract_strided_slice %38 {offsets = [0, 0], sizes = [8, 64], strides = [1, 1]} : vector<8x67xf32> to vector<8x64xf32>
    %c0_23 = arith.constant 0 : index
    %c0_24 = arith.constant 0 : index
    %40 = vector.load %arg11[%c0_23, %c0_24] : memref<1x64xf32, #tpu.memory_space<vmem>>, vector<1x64xf32>
    %41 = vector.broadcast %40 : vector<1x64xf32> to vector<8x64xf32>
    %42 = arith.addf %39, %41 : vector<8x64xf32>
    %43 = vector.extract_strided_slice %38 {offsets = [0, 64], sizes = [8, 1], strides = [1, 1]} : vector<8x67xf32> to vector<8x1xf32>
    %44 = vector.extract_strided_slice %38 {offsets = [0, 65], sizes = [8, 1], strides = [1, 1]} : vector<8x67xf32> to vector<8x1xf32>
    %45 = vector.extract_strided_slice %38 {offsets = [0, 66], sizes = [8, 1], strides = [1, 1]} : vector<8x67xf32> to vector<8x1xf32>
    %46 = tpu.iota {dimensions = array<i32: 1>} : vector<8x24xi32>
    %47 = vector.broadcast %3 : vector<8x1xi32> to vector<8x24xi32>
    %48 = arith.cmpi eq, %47, %46 : vector<8x24xi32>
    %49 = arith.extui %48 : vector<8x24xi1> to vector<8x24xi32>
    %50 = arith.sitofp %49 : vector<8x24xi32> to vector<8x24xf32>
    %c0_25 = arith.constant 0 : index
    %c0_26 = arith.constant 0 : index
    %51 = vector.load %arg12[%c0_25, %c0_26] : memref<24x64xf32, #tpu.memory_space<vmem>>, vector<24x64xf32>
    %cst_27 = arith.constant dense<0.000000e+00> : vector<8x64xf32>
    %52 = tpu.matmul %50, %51, %cst_27 {dimension_numbers = #tpu.dot_dimension_numbers<[1], [0], [0], [1], [0, 0, 1, 1], [], []>} : vector<8x24xf32>, vector<24x64xf32>, vector<8x64xf32> -> vector<8x64xf32>
    %53 = vector.extract_strided_slice %15 {offsets = [0, 32], sizes = [8, 1], strides = [1, 1]} : vector<8x34xf32> to vector<8x1xf32>
    %54 = vector.extract_strided_slice %15 {offsets = [0, 33], sizes = [8, 1], strides = [1, 1]} : vector<8x34xf32> to vector<8x1xf32>
    %c0_28 = arith.constant 0 : index
    %c0_29 = arith.constant 0 : index
    %55 = vector.load %arg13[%c0_28, %c0_29] : memref<5x64xf32, #tpu.memory_space<vmem>>, vector<1x64xf32>
    %c1 = arith.constant 1 : index
    %c0_30 = arith.constant 0 : index
    %56 = vector.load %arg13[%c1, %c0_30] : memref<5x64xf32, #tpu.memory_space<vmem>>, vector<1x64xf32>
    %c2 = arith.constant 2 : index
    %c0_31 = arith.constant 0 : index
    %57 = vector.load %arg13[%c2, %c0_31] : memref<5x64xf32, #tpu.memory_space<vmem>>, vector<1x64xf32>
    %c3 = arith.constant 3 : index
    %c0_32 = arith.constant 0 : index
    %58 = vector.load %arg13[%c3, %c0_32] : memref<5x64xf32, #tpu.memory_space<vmem>>, vector<1x64xf32>
    %c4 = arith.constant 4 : index
    %c0_33 = arith.constant 0 : index
    %59 = vector.load %arg13[%c4, %c0_33] : memref<5x64xf32, #tpu.memory_space<vmem>>, vector<1x64xf32>
    %60 = vector.broadcast %53 : vector<8x1xf32> to vector<8x64xf32>
    %61 = vector.broadcast %55 : vector<1x64xf32> to vector<8x64xf32>
    %62 = arith.subf %60, %61 : vector<8x64xf32>
    %63 = vector.broadcast %54 : vector<8x1xf32> to vector<8x64xf32>
    %64 = vector.broadcast %56 : vector<1x64xf32> to vector<8x64xf32>
    %65 = arith.subf %63, %64 : vector<8x64xf32>
    %66 = vector.broadcast %57 : vector<1x64xf32> to vector<8x64xf32>
    %67 = arith.mulf %62, %66 : vector<8x64xf32>
    %68 = vector.broadcast %58 : vector<1x64xf32> to vector<8x64xf32>
    %69 = arith.mulf %65, %68 : vector<8x64xf32>
    %70 = arith.addf %67, %69 : vector<8x64xf32>
    %71 = arith.mulf %62, %62 : vector<8x64xf32>
    %72 = arith.mulf %65, %65 : vector<8x64xf32>
    %73 = arith.addf %71, %72 : vector<8x64xf32>
    %74 = vector.broadcast %59 : vector<1x64xf32> to vector<8x64xf32>
    %75 = arith.mulf %73, %74 : vector<8x64xf32>
    %cst_34 = arith.constant 1.000000e-16 : f32
    %76 = vector.broadcast %cst_34 : f32 to vector<8x64xf32>
    %77 = arith.maximumf %75, %76 : vector<8x64xf32>
    %78 = math.rsqrt %77 : vector<8x64xf32>
    %79 = arith.mulf %70, %78 : vector<8x64xf32>
    %80 = vector.broadcast %44 : vector<8x1xf32> to vector<8x64xf32>
    %81 = arith.mulf %80, %52 : vector<8x64xf32>
    %82 = arith.addf %42, %81 : vector<8x64xf32>
    %83 = vector.broadcast %43 : vector<8x1xf32> to vector<8x64xf32>
    %84 = arith.mulf %83, %79 : vector<8x64xf32>
    %85 = arith.addf %82, %84 : vector<8x64xf32>
    %86 = vector.broadcast %45 : vector<8x1xf32> to vector<8x64xf32>
    %87 = arith.addf %85, %86 : vector<8x64xf32>
    %c0_35 = arith.constant 0 : index
    %c0_36 = arith.constant 0 : index
    %88 = vector.load %arg14[%c0_35, %c0_36] : memref<8x64xf32, #tpu.memory_space<vmem>>, vector<8x64xf32>
    tpu.vector_store %arg14[%c0_35, %c0_36], %87 {strides = array<i32>} : memref<8x64xf32, #tpu.memory_space<vmem>>, vector<8x64xf32>,
    return
  }
  func.func @transform_0(%arg0: i32) -> (i32, i32) {
    %c0_i32 = arith.constant 0 : i32
    %c0_i32_0 = arith.constant 0 : i32
    return %arg0, %c0_i32 : i32, i32
  }
  func.func @transform_1(%arg0: i32) -> (i32, i32) {
    %c0_i32 = arith.constant 0 : i32
    %c0_i32_0 = arith.constant 0 : i32
    return %arg0, %c0_i32 : i32, i32
  }
  func.func @transform_2(%arg0: i32) -> (i32, i32) {
    %c0_i32 = arith.constant 0 : i32
    %c0_i32_0 = arith.constant 0 : i32
    %c0_i32_1 = arith.constant 0 : i32
    return %c0_i32, %c0_i32_0 : i32, i32
  }
  func.func @transform_3(%arg0: i32) -> (i32, i32) {
    %c0_i32 = arith.constant 0 : i32
    %c0_i32_0 = arith.constant 0 : i32
    %c0_i32_1 = arith.constant 0 : i32
    return %c0_i32, %c0_i32_0 : i32, i32
  }
  func.func @transform_4(%arg0: i32) -> (i32, i32) {
    %c0_i32 = arith.constant 0 : i32
    %c0_i32_0 = arith.constant 0 : i32
    %c0_i32_1 = arith.constant 0 : i32
    return %c0_i32, %c0_i32_0 : i32, i32
  }
  func.func @transform_5(%arg0: i32) -> (i32, i32) {
    %c0_i32 = arith.constant 0 : i32
    %c0_i32_0 = arith.constant 0 : i32
    %c0_i32_1 = arith.constant 0 : i32
    return %c0_i32, %c0_i32_0 : i32, i32
  }
  func.func @transform_6(%arg0: i32) -> (i32, i32) {
    %c0_i32 = arith.constant 0 : i32
    %c0_i32_0 = arith.constant 0 : i32
    %c0_i32_1 = arith.constant 0 : i32
    return %c0_i32, %c0_i32_0 : i32, i32
  }
  func.func @transform_7(%arg0: i32) -> (i32, i32) {
    %c0_i32 = arith.constant 0 : i32
    %c0_i32_0 = arith.constant 0 : i32
    %c0_i32_1 = arith.constant 0 : i32
    return %c0_i32, %c0_i32_0 : i32, i32
  }
  func.func @transform_8(%arg0: i32) -> (i32, i32) {
    %c0_i32 = arith.constant 0 : i32
    %c0_i32_0 = arith.constant 0 : i32
    %c0_i32_1 = arith.constant 0 : i32
    return %c0_i32, %c0_i32_0 : i32, i32
  }
  func.func @transform_9(%arg0: i32) -> (i32, i32) {
    %c0_i32 = arith.constant 0 : i32
    %c0_i32_0 = arith.constant 0 : i32
    %c0_i32_1 = arith.constant 0 : i32
    return %c0_i32, %c0_i32_0 : i32, i32
  }
  func.func @transform_10(%arg0: i32) -> (i32, i32) {
    %c0_i32 = arith.constant 0 : i32
    %c0_i32_0 = arith.constant 0 : i32
    %c0_i32_1 = arith.constant 0 : i32
    return %c0_i32, %c0_i32_0 : i32, i32
  }
  func.func @transform_11(%arg0: i32) -> (i32, i32) {
    %c0_i32 = arith.constant 0 : i32
    %c0_i32_0 = arith.constant 0 : i32
    %c0_i32_1 = arith.constant 0 : i32
    return %c0_i32, %c0_i32_0 : i32, i32
  }
  func.func @transform_12(%arg0: i32) -> (i32, i32) {
    %c0_i32 = arith.constant 0 : i32
    %c0_i32_0 = arith.constant 0 : i32
    %c0_i32_1 = arith.constant 0 : i32
    return %c0_i32, %c0_i32_0 : i32, i32
  }
  func.func @transform_13(%arg0: i32) -> (i32, i32) {
    %c0_i32 = arith.constant 0 : i32
    %c0_i32_0 = arith.constant 0 : i32
    return %arg0, %c0_i32 : i32, i32
  }
}

</mosaic_0001>

<llo_original>
// kernel: tpu_custom_call.1
$region0: #{tpu_custom_call.1}
  #allocation0 [shape = 'u32[]', space=smem, size = 0x4, offset = 0x4, fixed_abs, tag = 'smem constant byte address 0x4 - core index']
  #allocation1 [shape = 'u32[144,128]{1,0:T(1,128)}', space=vmem, size = 0x12000, scoped, tag = 'internal scratch']
  %s0 = inlined_call_operand.vmem [shape: s32[8,3], index: 0, kind: input, shape index: {}]
  %s1 = inlined_call_operand.vmem [shape: f32[8,2], index: 1, kind: input, shape index: {}]
  %s2 = inlined_call_operand.vmem [shape: f32[128,34], index: 2, kind: input, shape index: {}]
  %s3 = inlined_call_operand.vmem [shape: f32[2,32], index: 3, kind: input, shape index: {}]
  %s4 = inlined_call_operand.vmem [shape: f32[1,32], index: 4, kind: input, shape index: {}]
  %s5 = inlined_call_operand.vmem [shape: f32[1,32], index: 5, kind: input, shape index: {}]
  %s6 = inlined_call_operand.vmem [shape: f32[1,32], index: 6, kind: input, shape index: {}]
  %s7 = inlined_call_operand.vmem [shape: f32[32,16], index: 7, kind: input, shape index: {}]
  %s8 = inlined_call_operand.vmem [shape: f32[1,16], index: 8, kind: input, shape index: {}]
  %s9 = inlined_call_operand.vmem [shape: f32[16,67], index: 9, kind: input, shape index: {}]
  %s10 = inlined_call_operand.vmem [shape: f32[1,64], index: 10, kind: input, shape index: {}]
  %s11 = inlined_call_operand.vmem [shape: f32[24,64], index: 11, kind: input, shape index: {}]
  %s12 = inlined_call_operand.vmem [shape: f32[5,64], index: 12, kind: input, shape index: {}]
  %s13 = inlined_call_operand.hbm [shape: f32[8,64], index: 13, kind: output, shape index: {}]
  %s14 = sld [smem:[#allocation0]]
  $region62: #{tpu_custom_call.1} parent=0
    _
  %s16 = ssub.s32 1, %s14
  %s17 = scalar_select 0, %s16, %s14
  $region1: #{tpu_custom_call.1} parent=0
    #allocation2 [shape = 'u8[4096]{0}', space=vmem, size = 0x1000, scoped, tag = 'output window, operand 0, single buffered']
    #allocation3 [shape = 's32[1]{0}', space=sflag, size = 0x4, scoped, tag = 'scoped memory for tpu_custom_call.1']
    %18 = vsyncpa [#allocation3], 0
    // Predicated region
    $region2: #{tpu_custom_call.1} parent=1 // pred_check
      _
    $region3: #{tpu_custom_call.1} parent=1 // pred_check_branch
      %20 = sbr.rel (0) target = $region5
    $region4: #{tpu_custom_call.1} parent=1 // pred_region
      _
    $region5: #{tpu_custom_call.1} parent=1 // pred_fallthru
      _
    // Predicated region
    $region6: #{tpu_custom_call.1} parent=1 // pred_check
      _
    $region7: #{tpu_custom_call.1} parent=1 // pred_check_branch
      %22 = sbr.rel (0) target = $region9
    $region8: #{tpu_custom_call.1} parent=1 // pred_region
      _
    $region9: #{tpu_custom_call.1} parent=1 // pred_fallthru
      _
    // Predicated region
    $region10: #{tpu_custom_call.1} parent=1 // pred_check
      _
    $region11: #{tpu_custom_call.1} parent=1 // pred_check_branch
      %24 = sbr.rel (0) target = $region13
    $region12: #{tpu_custom_call.1} parent=1 // pred_region
      _
    $region13: #{tpu_custom_call.1} parent=1 // pred_fallthru
      _
    // Predicated region
    $region14: #{tpu_custom_call.1} parent=1 // pred_check
      _
    $region15: #{tpu_custom_call.1} parent=1 // pred_check_branch
      %26 = sbr.rel (0) target = $region17
    $region16: #{tpu_custom_call.1} parent=1 // pred_region
      _
    $region17: #{tpu_custom_call.1} parent=1 // pred_fallthru
      _
    // Predicated region
    $region18: #{tpu_custom_call.1} parent=1 // pred_check
      _
    $region19: #{tpu_custom_call.1} parent=1 // pred_check_branch
      %28 = sbr.rel (0) target = $region21
    $region20: #{tpu_custom_call.1} parent=1 // pred_region
      _
    $region21: #{tpu_custom_call.1} parent=1 // pred_fallthru
      _
    // Predicated region
    $region22: #{tpu_custom_call.1} parent=1 // pred_check
      _
    $region23: #{tpu_custom_call.1} parent=1 // pred_check_branch
      %30 = sbr.rel (0) target = $region25
    $region24: #{tpu_custom_call.1} parent=1 // pred_region
      _
    $region25: #{tpu_custom_call.1} parent=1 // pred_fallthru
      _
    // Predicated region
    $region26: #{tpu_custom_call.1} parent=1 // pred_check
      _
    $region27: #{tpu_custom_call.1} parent=1 // pred_check_branch
      %32 = sbr.rel (0) target = $region29
    $region28: #{tpu_custom_call.1} parent=1 // pred_region
      _
    $region29: #{tpu_custom_call.1} parent=1 // pred_fallthru
      _
    // Predicated region
    $region30: #{tpu_custom_call.1} parent=1 // pred_check
      _
    $region31: #{tpu_custom_call.1} parent=1 // pred_check_branch
      %34 = sbr.rel (0) target = $region33
    $region32: #{tpu_custom_call.1} parent=1 // pred_region
      _
    $region33: #{tpu_custom_call.1} parent=1 // pred_fallthru
      _
    // Predicated region
    $region34: #{tpu_custom_call.1} parent=1 // pred_check
      _
    $region35: #{tpu_custom_call.1} parent=1 // pred_check_branch
      %36 = sbr.rel (0) target = $region37
    $region36: #{tpu_custom_call.1} parent=1 // pred_region
      _
    $region37: #{tpu_custom_call.1} parent=1 // pred_fallthru
      _
    // Predicated region
    $region38: #{tpu_custom_call.1} parent=1 // pred_check
      _
    $region39: #{tpu_custom_call.1} parent=1 // pred_check_branch
      %38 = sbr.rel (0) target = $region41
    $region40: #{tpu_custom_call.1} parent=1 // pred_region
      _
    $region41: #{tpu_custom_call.1} parent=1 // pred_fallthru
      _
    // Predicated region
    $region42: #{tpu_custom_call.1} parent=1 // pred_check
      _
    $region43: #{tpu_custom_call.1} parent=1 // pred_check_branch
      %40 = sbr.rel (0) target = $region45
    $region44: #{tpu_custom_call.1} parent=1 // pred_region
      _
    $region45: #{tpu_custom_call.1} parent=1 // pred_fallthru
      _
    // Predicated region
    $region46: #{tpu_custom_call.1} parent=1 // pred_check
      _
    $region47: #{tpu_custom_call.1} parent=1 // pred_check_branch
      %42 = sbr.rel (0) target = $region49
    $region48: #{tpu_custom_call.1} parent=1 // pred_region
      _
    $region49: #{tpu_custom_call.1} parent=1 // pred_fallthru
      _
    // Predicated region
    $region50: #{tpu_custom_call.1} parent=1 // pred_check
      _
    $region51: #{tpu_custom_call.1} parent=1 // pred_check_branch
      %44 = sbr.rel (0) target = $region53
    $region52: #{tpu_custom_call.1} parent=1 // pred_region
      _
    $region53: #{tpu_custom_call.1} parent=1 // pred_fallthru
      _
    %v45 = vld [vmem:[%s0] sm:$0xff]
    %v46 = vlaneseq
    %v47 = vand.u32 %v46, 127
    %48 = vset.pattern.permute.xlu0 0
    %49 = vperm.xlu0 %48, %v45
    %v50 = vpop.permute.xlu0 %49
    %vm51 = vcmp.eq.s32.totalorder %v47, %v50
    %v52 = vadd.s32 %v45, 64
    %53 = vset.pattern.permute.xlu0 1
    %54 = vperm.xlu0 %53, %v52
    %v55 = vpop.permute.xlu0 %54
    %vm56 = vcmp.eq.s32.totalorder %v47, %v55
    %vm57 = vmor %vm51, %vm56
    %v58 = vsel %vm57, 1, 0
    %v59 = vcvt.s32.f32 %v58
    %v60 = vld [vmem:[%s2] sm:$0xff]
    %v61 = vld [vmem:[%s2 + $0x8] sm:$0xff]
    %v62 = vld [vmem:[%s2 + $0x10] sm:$0xff]
    %v63 = vld [vmem:[%s2 + $0x18] sm:$0xff]
    %v64 = vld [vmem:[%s2 + $0x20] sm:$0xff]
    %v65 = vld [vmem:[%s2 + $0x28] sm:$0xff]
    %v66 = vld [vmem:[%s2 + $0x30] sm:$0xff]
    %v67 = vld [vmem:[%s2 + $0x38] sm:$0xff]
    %v68 = vld [vmem:[%s2 + $0x40] sm:$0xff]
    %v69 = vld [vmem:[%s2 + $0x48] sm:$0xff]
    %v70 = vld [vmem:[%s2 + $0x50] sm:$0xff]
    %v71 = vld [vmem:[%s2 + $0x58] sm:$0xff]
    %v72 = vld [vmem:[%s2 + $0x60] sm:$0xff]
    %v73 = vld [vmem:[%s2 + $0x68] sm:$0xff]
    %v74 = vld [vmem:[%s2 + $0x70] sm:$0xff]
    %v75 = vld [vmem:[%s2 + $0x78] sm:$0xff]
    %76 = vmatprep.subr.mxu0 0.0
    %77 = vmatpush1.msra.mxu0 %v60
    %78 = vmatprep.subr.mxu0 0.0
    %79 = vmatpush1.msra.mxu0 %v61
    %80 = vmatprep.subr.mxu0 0.0
    %81 = vmatpush1.msra.mxu0 %v62
    %82 = vmatprep.subr.mxu0 0.0
    %83 = vmatpush1.msra.mxu0 %v63
    %84 = vmatprep.subr.mxu0 0.0
    %85 = vmatpush1.msra.mxu0 %v64
    %86 = vmatprep.subr.mxu0 0.0
    %87 = vmatpush1.msra.mxu0 %v65
    %88 = vmatprep.subr.mxu0 0.0
    %89 = vmatpush1.msra.mxu0 %v66
    %90 = vmatprep.subr.mxu0 0.0
    %91 = vmatpush1.msra.mxu0 %v67
    %92 = vmatprep.subr.mxu0 0.0
    %93 = vmatpush1.msra.mxu0 %v68
    %94 = vmatprep.subr.mxu0 0.0
    %95 = vmatpush1.msra.mxu0 %v69
    %96 = vmatprep.subr.mxu0 0.0
    %97 = vmatpush1.msra.mxu0 %v70
    %98 = vmatprep.subr.mxu0 0.0
    %99 = vmatpush1.msra.mxu0 %v71
    %100 = vmatprep.subr.mxu0 0.0
    %101 = vmatpush1.msra.mxu0 %v72
    %102 = vmatprep.subr.mxu0 0.0
    %103 = vmatpush1.msra.mxu0 %v73
    %104 = vmatprep.subr.mxu0 0.0
    %105 = vmatpush1.msra.mxu0 %v74
    %106 = vmatprep.subr.mxu0 0.0
    %107 = vmatpush1.msra.mxu0 %v75
    %108 = vmatprep.subr.mxu0 0.0
    %109 = vmatpush1.msra.mxu0 0.0
    %110 = vmatprep.subr.mxu0 0.0
    %111 = vmatpush1.msra.mxu0 0.0
    %112 = vmatprep.subr.mxu0 0.0
    %113 = vmatpush1.msra.mxu0 0.0
    %114 = vmatprep.subr.mxu0 0.0
    %115 = vmatpush1.msra.mxu0 0.0
    %116 = vmatprep.subr.mxu0 0.0
    %117 = vmatpush1.msra.mxu0 0.0
    %118 = vmatprep.subr.mxu0 0.0
    %119 = vmatpush1.msra.mxu0 0.0
    %120 = vmatprep.subr.mxu0 0.0
    %121 = vmatpush1.msra.mxu0 0.0
    %122 = vmatprep.subr.mxu0 0.0
    %123 = vmatpush1.msra.mxu0 0.0
    %124 = vmatprep.subr.mxu0 0.0
    %125 = vmatpush1.msra.mxu0 0.0
    %126 = vmatprep.subr.mxu0 0.0
    %127 = vmatpush1.msra.mxu0 0.0
    %128 = vmatprep.subr.mxu0 0.0
    %129 = vmatpush1.msra.mxu0 0.0
    %130 = vmatprep.subr.mxu0 0.0
    %131 = vmatpush1.msra.mxu0 0.0
    %132 = vmatprep.subr.mxu0 0.0
    %133 = vmatpush1.msra.mxu0 0.0
    %134 = vmatprep.subr.mxu0 0.0
    %135 = vmatpush1.msra.mxu0 0.0
    %136 = vmatprep.subr.mxu0 0.0
    %137 = vmatpush1.msra.mxu0 0.0
    %138 = vmatprep.subr.mxu0 0.0
    %139 = vmatpush1.msra.mxu0 0.0
    %140 = vmatprep.mubr.f32.mxu0 0.0
    %141 = vmatmul.mubr.f32.gmra.mrb[0].mxu0 %v59
    %v142 = vpop.f32.mrb[0].mxu0
    %v143 = vadd.f32 0.0, %v142
    %v144 = vpop.f32.mrb[0].mxu0
    %145 = vdwg.mxu0
    %v146 = vld [vmem:[%s1] sm:$0xff]
    %v147 = vld [vmem:[%s3] sm:$0x3]
    %vm148 = vcmask 15360
    %v150 = vsel %vm148, %v146, 0
    %vm152 = vcmask 1041408
    %v154 = vsel %vm152, %v147, 0
    %156 = vmatprep.subr.mxu0 0.0
    %157 = vmatpush1.msra.mxu0 %v154
    %158 = vmatprep.subr.mxu0 0.0
    %159 = vmatpush1.msra.mxu0 0.0
    %160 = vmatprep.subr.mxu0 0.0
    %161 = vmatpush1.msra.mxu0 0.0
    %162 = vmatprep.subr.mxu0 0.0
    %163 = vmatpush1.msra.mxu0 0.0
    %164 = vmatprep.subr.mxu0 0.0
    %165 = vmatpush1.msra.mxu0 0.0
    %166 = vmatprep.subr.mxu0 0.0
    %167 = vmatpush1.msra.mxu0 0.0
    %168 = vmatprep.subr.mxu0 0.0
    %169 = vmatpush1.msra.mxu0 0.0
    %170 = vmatprep.subr.mxu0 0.0
    %171 = vmatpush1.msra.mxu0 0.0
    %172 = vmatprep.subr.mxu0 0.0
    %173 = vmatpush1.msra.mxu0 0.0
    %174 = vmatprep.subr.mxu0 0.0
    %175 = vmatpush1.msra.mxu0 0.0
    %176 = vmatprep.subr.mxu0 0.0
    %177 = vmatpush1.msra.mxu0 0.0
    %178 = vmatprep.subr.mxu0 0.0
    %179 = vmatpush1.msra.mxu0 0.0
    %180 = vmatprep.subr.mxu0 0.0
    %181 = vmatpush1.msra.mxu0 0.0
    %182 = vmatprep.subr.mxu0 0.0
    %183 = vmatpush1.msra.mxu0 0.0
    %184 = vmatprep.subr.mxu0 0.0
    %185 = vmatpush1.msra.mxu0 0.0
    %186 = vmatprep.subr.mxu0 0.0
    %187 = vmatpush1.msra.mxu0 0.0
    %188 = vmatprep.subr.mxu0 0.0
    %189 = vmatpush1.msra.mxu0 0.0
    %190 = vmatprep.subr.mxu0 0.0
    %191 = vmatpush1.msra.mxu0 0.0
    %192 = vmatprep.subr.mxu0 0.0
    %193 = vmatpush1.msra.mxu0 0.0
    %194 = vmatprep.subr.mxu0 0.0
    %195 = vmatpush1.msra.mxu0 0.0
    %196 = vmatprep.subr.mxu0 0.0
    %197 = vmatpush1.msra.mxu0 0.0
    %198 = vmatprep.subr.mxu0 0.0
    %199 = vmatpush1.msra.mxu0 0.0
    %200 = vmatprep.subr.mxu0 0.0
    %201 = vmatpush1.msra.mxu0 0.0
    %202 = vmatprep.subr.mxu0 0.0
    %203 = vmatpush1.msra.mxu0 0.0
    %204 = vmatprep.subr.mxu0 0.0
    %205 = vmatpush1.msra.mxu0 0.0
    %206 = vmatprep.subr.mxu0 0.0
    %207 = vmatpush1.msra.mxu0 0.0
    %208 = vmatprep.subr.mxu0 0.0
    %209 = vmatpush1.msra.mxu0 0.0
    %210 = vmatprep.subr.mxu0 0.0
    %211 = vmatpush1.msra.mxu0 0.0
    %212 = vmatprep.subr.mxu0 0.0
    %213 = vmatpush1.msra.mxu0 0.0
    %214 = vmatprep.subr.mxu0 0.0
    %215 = vmatpush1.msra.mxu0 0.0
    %216 = vmatprep.subr.mxu0 0.0
    %217 = vmatpush1.msra.mxu0 0.0
    %218 = vmatprep.subr.mxu0 0.0
    %219 = vmatpush1.msra.mxu0 0.0
    %220 = vmatprep.mubr.f32.mxu0 0.0
    %221 = vmatmul.mubr.f32.gmra.mrb[0].mxu0 %v150
    %v222 = vpop.f32.mrb[0].mxu0
    %v223 = vadd.f32 0.0, %v222
    %v224 = vpop.f32.mrb[0].mxu0
    %225 = vdwg.mxu0
    %v226 = vadd.f32 %v143, %v223
    %v227 = vld [vmem:[%s4] sm:$0x1]
    %v229 = vlaneseq
    %v230 = vshrl.u32 %v229, 7
    %v231 = vsub.s32 0, %v230
    %v232 = vrot.slane %v227, %v231
    %v234 = vadd.f32 %v226, %v232
    %v235 = vld [vmem:[%s5] sm:$0x1]
    %v237 = vlaneseq
    %v238 = vshrl.u32 %v237, 7
    %v239 = vsub.s32 0, %v238
    %v240 = vrot.slane %v235, %v239
    %v242 = vmul.f32 %v234, %v240
    %v243 = vld [vmem:[%s6] sm:$0x1]
    %v245 = vlaneseq
    %v246 = vshrl.u32 %v245, 7
    %v247 = vsub.s32 0, %v246
    %v248 = vrot.slane %v243, %v247
    %v250 = vadd.f32 %v242, %v248
    %v251 = vmax.f32 %v250, 0.0
    %v252 = vld [vmem:[%s7] sm:$0xff]
    %v253 = vld [vmem:[%s7 + $0x8] sm:$0xff]
    %v254 = vld [vmem:[%s7 + $0x10] sm:$0xff]
    %v255 = vld [vmem:[%s7 + $0x18] sm:$0xff]
    %v256 = vld [vmem:[%s8] sm:$0x1]
    %v258 = vlaneseq
    %v259 = vshrl.u32 %v258, 7
    %v260 = vsub.s32 0, %v259
    %v261 = vrot.slane %v256, %v260
    %vm263 = vcmask 261120
    %v265 = vsel %vm263, %v251, 0
    %267 = vmatprep.subr.mxu0 0.0
    %268 = vmatpush1.msra.mxu0 %v252
    %269 = vmatprep.subr.mxu0 0.0
    %270 = vmatpush1.msra.mxu0 %v253
    %271 = vmatprep.subr.mxu0 0.0
    %272 = vmatpush1.msra.mxu0 %v254
    %273 = vmatprep.subr.mxu0 0.0
    %274 = vmatpush1.msra.mxu0 %v255
    %275 = vmatprep.subr.mxu0 0.0
    %276 = vmatpush1.msra.mxu0 0.0
    %277 = vmatprep.subr.mxu0 0.0
    %278 = vmatpush1.msra.mxu0 0.0
    %279 = vmatprep.subr.mxu0 0.0
    %280 = vmatpush1.msra.mxu0 0.0
    %281 = vmatprep.subr.mxu0 0.0
    %282 = vmatpush1.msra.mxu0 0.0
    %283 = vmatprep.subr.mxu0 0.0
    %284 = vmatpush1.msra.mxu0 0.0
    %285 = vmatprep.subr.mxu0 0.0
    %286 = vmatpush1.msra.mxu0 0.0
    %287 = vmatprep.subr.mxu0 0.0
    %288 = vmatpush1.msra.mxu0 0.0
    %289 = vmatprep.subr.mxu0 0.0
    %290 = vmatpush1.msra.mxu0 0.0
    %291 = vmatprep.subr.mxu0 0.0
    %292 = vmatpush1.msra.mxu0 0.0
    %293 = vmatprep.subr.mxu0 0.0
    %294 = vmatpush1.msra.mxu0 0.0
    %295 = vmatprep.subr.mxu0 0.0
    %296 = vmatpush1.msra.mxu0 0.0
    %297 = vmatprep.subr.mxu0 0.0
    %298 = vmatpush1.msra.mxu0 0.0
    %299 = vmatprep.subr.mxu0 0.0
    %300 = vmatpush1.msra.mxu0 0.0
    %301 = vmatprep.subr.mxu0 0.0
    %302 = vmatpush1.msra.mxu0 0.0
    %303 = vmatprep.subr.mxu0 0.0
    %304 = vmatpush1.msra.mxu0 0.0
    %305 = vmatprep.subr.mxu0 0.0
    %306 = vmatpush1.msra.mxu0 0.0
    %307 = vmatprep.subr.mxu0 0.0
    %308 = vmatpush1.msra.mxu0 0.0
    %309 = vmatprep.subr.mxu0 0.0
    %310 = vmatpush1.msra.mxu0 0.0
    %311 = vmatprep.subr.mxu0 0.0
    %312 = vmatpush1.msra.mxu0 0.0
    %313 = vmatprep.subr.mxu0 0.0
    %314 = vmatpush1.msra.mxu0 0.0
    %315 = vmatprep.subr.mxu0 0.0
    %316 = vmatpush1.msra.mxu0 0.0
    %317 = vmatprep.subr.mxu0 0.0
    %318 = vmatpush1.msra.mxu0 0.0
    %319 = vmatprep.subr.mxu0 0.0
    %320 = vmatpush1.msra.mxu0 0.0
    %321 = vmatprep.subr.mxu0 0.0
    %322 = vmatpush1.msra.mxu0 0.0
    %323 = vmatprep.subr.mxu0 0.0
    %324 = vmatpush1.msra.mxu0 0.0
    %325 = vmatprep.subr.mxu0 0.0
    %326 = vmatpush1.msra.mxu0 0.0
    %327 = vmatprep.subr.mxu0 0.0
    %328 = vmatpush1.msra.mxu0 0.0
    %329 = vmatprep.subr.mxu0 0.0
    %330 = vmatpush1.msra.mxu0 0.0
    %331 = vmatprep.mubr.f32.mxu0 0.0
    %332 = vmatmul.mubr.f32.gmra.mrb[0].mxu0 %v265
    %v333 = vpop.f32.mrb[0].mxu0
    %v334 = vadd.f32 %v261, %v333
    %v335 = vpop.f32.mrb[0].mxu0
    %336 = vdwg.mxu0
    %v337 = vld [vmem:[%s9] sm:$0xff]
    %v338 = vld [vmem:[%s9 + $0x8] sm:$0xff]
    %vm339 = vcmask 130048
    %v341 = vsel %vm339, %v334, 0
    %343 = vmatprep.subr.mxu0 0.0
    %344 = vmatpush1.msra.mxu0 %v337
    %345 = vmatprep.subr.mxu0 0.0
    %346 = vmatpush1.msra.mxu0 %v338
    %347 = vmatprep.subr.mxu0 0.0
    %348 = vmatpush1.msra.mxu0 0.0
    %349 = vmatprep.subr.mxu0 0.0
    %350 = vmatpush1.msra.mxu0 0.0
    %351 = vmatprep.subr.mxu0 0.0
    %352 = vmatpush1.msra.mxu0 0.0
    %353 = vmatprep.subr.mxu0 0.0
    %354 = vmatpush1.msra.mxu0 0.0
    %355 = vmatprep.subr.mxu0 0.0
    %356 = vmatpush1.msra.mxu0 0.0
    %357 = vmatprep.subr.mxu0 0.0
    %358 = vmatpush1.msra.mxu0 0.0
    %359 = vmatprep.subr.mxu0 0.0
    %360 = vmatpush1.msra.mxu0 0.0
    %361 = vmatprep.subr.mxu0 0.0
    %362 = vmatpush1.msra.mxu0 0.0
    %363 = vmatprep.subr.mxu0 0.0
    %364 = vmatpush1.msra.mxu0 0.0
    %365 = vmatprep.subr.mxu0 0.0
    %366 = vmatpush1.msra.mxu0 0.0
    %367 = vmatprep.subr.mxu0 0.0
    %368 = vmatpush1.msra.mxu0 0.0
    %369 = vmatprep.subr.mxu0 0.0
    %370 = vmatpush1.msra.mxu0 0.0
    %371 = vmatprep.subr.mxu0 0.0
    %372 = vmatpush1.msra.mxu0 0.0
    %373 = vmatprep.subr.mxu0 0.0
    %374 = vmatpush1.msra.mxu0 0.0
    %375 = vmatprep.subr.mxu0 0.0
    %376 = vmatpush1.msra.mxu0 0.0
    %377 = vmatprep.subr.mxu0 0.0
    %378 = vmatpush1.msra.mxu0 0.0
    %379 = vmatprep.subr.mxu0 0.0
    %380 = vmatpush1.msra.mxu0 0.0
    %381 = vmatprep.subr.mxu0 0.0
    %382 = vmatpush1.msra.mxu0 0.0
    %383 = vmatprep.subr.mxu0 0.0
    %384 = vmatpush1.msra.mxu0 0.0
    %385 = vmatprep.subr.mxu0 0.0
    %386 = vmatpush1.msra.mxu0 0.0
    %387 = vmatprep.subr.mxu0 0.0
    %388 = vmatpush1.msra.mxu0 0.0
    %389 = vmatprep.subr.mxu0 0.0
    %390 = vmatpush1.msra.mxu0 0.0
    %391 = vmatprep.subr.mxu0 0.0
    %392 = vmatpush1.msra.mxu0 0.0
    %393 = vmatprep.subr.mxu0 0.0
    %394 = vmatpush1.msra.mxu0 0.0
    %395 = vmatprep.subr.mxu0 0.0
    %396 = vmatpush1.msra.mxu0 0.0
    %397 = vmatprep.subr.mxu0 0.0
    %398 = vmatpush1.msra.mxu0 0.0
    %399 = vmatprep.subr.mxu0 0.0
    %400 = vmatpush1.msra.mxu0 0.0
    %401 = vmatprep.subr.mxu0 0.0
    %402 = vmatpush1.msra.mxu0 0.0
    %403 = vmatprep.subr.mxu0 0.0
    %404 = vmatpush1.msra.mxu0 0.0
    %405 = vmatprep.subr.mxu0 0.0
    %406 = vmatpush1.msra.mxu0 0.0
    %407 = vmatprep.mubr.f32.mxu0 0.0
    %408 = vmatmul.mubr.f32.gmra.mrb[0].mxu0 %v341
    %v409 = vpop.f32.mrb[0].mxu0
    %v410 = vadd.f32 0.0, %v409
    %v411 = vpop.f32.mrb[0].mxu0
    %412 = vdwg.mxu0
    %v413 = vld [vmem:[%s10] sm:$0x1]
    %v415 = vlaneseq
    %v416 = vshrl.u32 %v415, 7
    %v417 = vsub.s32 0, %v416
    %v418 = vrot.slane %v413, %v417
    %v420 = vadd.f32 %v410, %v418
    %421 = vset.pattern.permute.xlu0 2
    %422 = vperm.xlu0 %421, %v45
    %v423 = vpop.permute.xlu0 %422
    %vm424 = vcmp.eq.s32.totalorder %v423, %v47
    %v425 = vsel %vm424, 1, 0
    %v426 = vcvt.s32.f32 %v425
    %v427 = vld [vmem:[%s11] sm:$0xff]
    %v428 = vld [vmem:[%s11 + $0x8] sm:$0xff]
    %v429 = vld [vmem:[%s11 + $0x10] sm:$0xff]
    %vm430 = vcmask 195584
    %v432 = vsel %vm430, %v426, 0
    %434 = vmatprep.subr.mxu0 0.0
    %435 = vmatpush1.msra.mxu0 %v427
    %436 = vmatprep.subr.mxu0 0.0
    %437 = vmatpush1.msra.mxu0 %v428
    %438 = vmatprep.subr.mxu0 0.0
    %439 = vmatpush1.msra.mxu0 %v429
    %440 = vmatprep.subr.mxu0 0.0
    %441 = vmatpush1.msra.mxu0 0.0
    %442 = vmatprep.subr.mxu0 0.0
    %443 = vmatpush1.msra.mxu0 0.0
    %444 = vmatprep.subr.mxu0 0.0
    %445 = vmatpush1.msra.mxu0 0.0
    %446 = vmatprep.subr.mxu0 0.0
    %447 = vmatpush1.msra.mxu0 0.0
    %448 = vmatprep.subr.mxu0 0.0
    %449 = vmatpush1.msra.mxu0 0.0
    %450 = vmatprep.subr.mxu0 0.0
    %451 = vmatpush1.msra.mxu0 0.0
    %452 = vmatprep.subr.mxu0 0.0
    %453 = vmatpush1.msra.mxu0 0.0
    %454 = vmatprep.subr.mxu0 0.0
    %455 = vmatpush1.msra.mxu0 0.0
    %456 = vmatprep.subr.mxu0 0.0
    %457 = vmatpush1.msra.mxu0 0.0
    %458 = vmatprep.subr.mxu0 0.0
    %459 = vmatpush1.msra.mxu0 0.0
    %460 = vmatprep.subr.mxu0 0.0
    %461 = vmatpush1.msra.mxu0 0.0
    %462 = vmatprep.subr.mxu0 0.0
    %463 = vmatpush1.msra.mxu0 0.0
    %464 = vmatprep.subr.mxu0 0.0
    %465 = vmatpush1.msra.mxu0 0.0
    %466 = vmatprep.subr.mxu0 0.0
    %467 = vmatpush1.msra.mxu0 0.0
    %468 = vmatprep.subr.mxu0 0.0
    %469 = vmatpush1.msra.mxu0 0.0
    %470 = vmatprep.subr.mxu0 0.0
    %471 = vmatpush1.msra.mxu0 0.0
    %472 = vmatprep.subr.mxu0 0.0
    %473 = vmatpush1.msra.mxu0 0.0
    %474 = vmatprep.subr.mxu0 0.0
    %475 = vmatpush1.msra.mxu0 0.0
    %476 = vmatprep.subr.mxu0 0.0
    %477 = vmatpush1.msra.mxu0 0.0
    %478 = vmatprep.subr.mxu0 0.0
    %479 = vmatpush1.msra.mxu0 0.0
    %480 = vmatprep.subr.mxu0 0.0
    %481 = vmatpush1.msra.mxu0 0.0
    %482 = vmatprep.subr.mxu0 0.0
    %483 = vmatpush1.msra.mxu0 0.0
    %484 = vmatprep.subr.mxu0 0.0
    %485 = vmatpush1.msra.mxu0 0.0
    %486 = vmatprep.subr.mxu0 0.0
    %487 = vmatpush1.msra.mxu0 0.0
    %488 = vmatprep.subr.mxu0 0.0
    %489 = vmatpush1.msra.mxu0 0.0
    %490 = vmatprep.subr.mxu0 0.0
    %491 = vmatpush1.msra.mxu0 0.0
    %492 = vmatprep.subr.mxu0 0.0
    %493 = vmatpush1.msra.mxu0 0.0
    %494 = vmatprep.subr.mxu0 0.0
    %495 = vmatpush1.msra.mxu0 0.0
    %496 = vmatprep.subr.mxu0 0.0
    %497 = vmatpush1.msra.mxu0 0.0
    %498 = vmatprep.mubr.f32.mxu0 0.0
    %499 = vmatmul.mubr.f32.gmra.mrb[0].mxu0 %v432
    %v500 = vpop.f32.mrb[0].mxu0
    %v501 = vadd.f32 0.0, %v500
    %v502 = vpop.f32.mrb[0].mxu0
    %503 = vdwg.mxu0
    %v504 = vld [vmem:[%s12] sm:$0x1]
    %v505 = vld [vmem:[%s12 + $0x1] sm:$0x1]
    %v506 = vld [vmem:[%s12 + $0x2] sm:$0x1]
    %v507 = vld [vmem:[%s12 + $0x3] sm:$0x1]
    %v508 = vld [vmem:[%s12 + $0x4] sm:$0x1]
    %510 = vset.pattern.permute.xlu0 32
    %511 = vperm.xlu0 %510, %v143
    %v512 = vpop.permute.xlu0 %511
    %v514 = vlaneseq
    %v515 = vshrl.u32 %v514, 7
    %v516 = vsub.s32 0, %v515
    %v517 = vrot.slane %v504, %v516
    %v518 = vsub.f32 %v512, %v517
    %519 = vset.pattern.permute.xlu0 33
    %520 = vperm.xlu0 %519, %v143
    %v521 = vpop.permute.xlu0 %520
    %v523 = vlaneseq
    %v524 = vshrl.u32 %v523, 7
    %v525 = vsub.s32 0, %v524
    %v526 = vrot.slane %v505, %v525
    %v527 = vsub.f32 %v521, %v526
    %v528 = vlaneseq
    %v529 = vshrl.u32 %v528, 7
    %v530 = vsub.s32 0, %v529
    %v531 = vrot.slane %v506, %v530
    %v532 = vmul.f32 %v518, %v531
    %v533 = vlaneseq
    %v534 = vshrl.u32 %v533, 7
    %v535 = vsub.s32 0, %v534
    %v536 = vrot.slane %v507, %v535
    %v537 = vmul.f32 %v527, %v536
    %v538 = vadd.f32 %v532, %v537
    %v539 = vmul.f32 %v518, %v518
    %v540 = vmul.f32 %v527, %v527
    %v541 = vadd.f32 %v539, %v540
    %v542 = vlaneseq
    %v543 = vshrl.u32 %v542, 7
    %v544 = vsub.s32 0, %v543
    %v545 = vrot.slane %v508, %v544
    %v546 = vmul.f32 %v541, %v545
    %v547 = vmax.f32 %v546, 1e-16
    %v548 = vrsqrt.pop %v547
    %v549 = vmul.f32 %v538, %v548
    %551 = vset.pattern.permute.xlu0 65
    %552 = vperm.xlu0 %551, %v410
    %v553 = vpop.permute.xlu0 %552
    %v555 = vmul.f32 %v553, %v501
    %v556 = vadd.f32 %v420, %v555
    %557 = vset.pattern.permute.xlu0 64
    %558 = vperm.xlu0 %557, %v410
    %v559 = vpop.permute.xlu0 %558
    %v561 = vmul.f32 %v559, %v549
    %v562 = vadd.f32 %v556, %v561
    %563 = vset.pattern.permute.xlu0 66
    %564 = vperm.xlu0 %563, %v410
    %v565 = vpop.permute.xlu0 %564
    %v567 = vadd.f32 %v562, %v565
    %vm568 = vcmask 523264
    %569 = vst.msk [vmem:[#allocation2] sm:$0xff] %vm568, %v567
    // Predicated region
    $region54: #{tpu_custom_call.1} parent=1 // pred_check
      _
    $region55: #{tpu_custom_call.1} parent=1 // pred_check_branch
      %571 = sbr.rel (0) target = $region57
    $region56: #{tpu_custom_call.1} parent=1 // pred_region
      %s573 = ssub.s32 128, 128
      %574 = vsyncadd [#allocation3], %s573
      %s576 = sshll.u32 [#allocation2], 4
      %s577 = int_to_ptr.vmem [resolvable:$true] %s576
      %579 = dma.vmem_to_hbm [thread:$0]  %s577, 128, %s13, [#allocation3]
    $region57: #{tpu_custom_call.1} parent=1 // pred_fallthru
      _
    // Predicated region
    $region58: #{tpu_custom_call.1} parent=1 // pred_check
      _
    $region59: #{tpu_custom_call.1} parent=1 // pred_check_branch
      %581 = sbr.rel (0) target = $region61
    $region60: #{tpu_custom_call.1} parent=1 // pred_region
      %582 = dma.done [#allocation3], 128
    $region61: #{tpu_custom_call.1} parent=1 // pred_fallthru
      _
    %583 = vsyncpa [#allocation3], 1

</llo_original>
